<compile_context>
chip_gen: v5e
topology: v5e:2x2
jax: 0.10.0
libtpu: 0.0.40
codegen_flags: <defaults>
</compile_context>

<pallas_src>
import functools

import numpy as np
import jax
import jax.numpy as jnp
from jax import lax
from jax.experimental import pallas as pl
from jax.experimental.pallas import tpu as pltpu


# ----------------------------------------------------------------------------
# Kernels
# ----------------------------------------------------------------------------
def _ws_linear_single_block_kernel(x_ref, w_ref, b_ref, o_ref, *, wt_scale):
    """Whole problem in VMEM: one MXU dot, scale+bias epilogue."""
    acc = lax.dot_general(
        x_ref[...], w_ref[...],
        dimension_numbers=(((1,), (1,)), ((), ())),   # x @ W.T, W untransposed
        preferred_element_type=jnp.float32,
    )
    o_ref[...] = (acc * wt_scale + b_ref[...].astype(jnp.float32)).astype(o_ref.dtype)


def _ws_linear_kernel_acc_out(x_ref, w_ref, b_ref, o_ref, *, wt_scale):
    """Tiled path, f32 output: accumulate directly into the resident output
    block (no VMEM scratch). Grid = (M/tm, N/tn, K/tk), K innermost."""
    k = pl.program_id(2)

    @pl.when(k == 0)
    def _():
        o_ref[...] = jnp.zeros_like(o_ref)

    o_ref[...] += lax.dot_general(
        x_ref[...], w_ref[...],
        dimension_numbers=(((1,), (1,)), ((), ())),
        preferred_element_type=jnp.float32,
    )

    @pl.when(k == pl.num_programs(2) - 1)
    def _():
        # wt_scale applied once per output tile (hoisted out of the K loop).
        o_ref[...] = o_ref[...] * wt_scale + b_ref[...]


def _ws_linear_kernel_scratch(x_ref, w_ref, b_ref, o_ref, acc_ref, *, wt_scale):
    """Tiled path for non-f32 outputs: f32 scratch accumulator."""
    k = pl.program_id(2)

    @pl.when(k == 0)
    def _():
        acc_ref[...] = jnp.zeros_like(acc_ref)

    acc_ref[...] += lax.dot_general(
        x_ref[...], w_ref[...],
        dimension_numbers=(((1,), (1,)), ((), ())),
        preferred_element_type=jnp.float32,
    )

    @pl.when(k == pl.num_programs(2) - 1)
    def _():
        o_ref[...] = (acc_ref[...] * wt_scale
                      + b_ref[...].astype(jnp.float32)).astype(o_ref.dtype)


# ----------------------------------------------------------------------------
# Wrapper
# ----------------------------------------------------------------------------
def _pick_tile(dim, preferred, align):
    """Largest multiple of `align` that divides `dim` and is <= preferred;
    falls back to the full dim (block == array dim is always legal)."""
    if dim <= preferred or dim % align != 0:
        return dim
    t = (preferred // align) * align
    while t >= align:
        if dim % t == 0:
            return t
        t -= align
    return dim


def ws_linear(x, weight, bias, wt_scale, *, tm=256, tn=256, tk=512,
              single_block=None):
    """x: (M, in_dim), weight: (out_dim, in_dim), bias: (out_dim,)."""
    M, K = x.shape
    N, K_w = weight.shape
    assert K == K_w, "weight must be (out_dim, in_dim)"
    wt_scale = float(wt_scale)
    b2d = bias.reshape(1, N)

    # --- Small-problem fast path: everything fits comfortably in VMEM. ---
    if single_block is None:
        total_bytes = 4 * (M * K + N * K + M * N + N)
        single_block = total_bytes <= 4 * 1024 * 1024

    if single_block:
        kernel = functools.partial(_ws_linear_single_block_kernel,
                                   wt_scale=wt_scale)
        return pl.pallas_call(
            kernel,
            out_shape=jax.ShapeDtypeStruct((M, N), x.dtype),
        )(x, weight, b2d)

    # --- Tiled path. ---
    tm = _pick_tile(M, tm, 8)      # sublane-aligned
    tn = _pick_tile(N, tn, 128)    # lane-dense output stores (>=128)
    tk = _pick_tile(K, tk, 128)

    grid = (M // tm, N // tn, K // tk)

    in_specs = [
        pl.BlockSpec((tm, tk), lambda i, j, k: (i, k)),   # x tile
        pl.BlockSpec((tn, tk), lambda i, j, k: (j, k)),   # W tile (untransposed)
        pl.BlockSpec((1, tn), lambda i, j, k: (0, j)),    # bias tile
    ]
    out_spec = pl.BlockSpec((tm, tn), lambda i, j, k: (i, j))

    if jnp.dtype(x.dtype) == jnp.float32:
        kernel = functools.partial(_ws_linear_kernel_acc_out, wt_scale=wt_scale)
        scratch = []
    else:
        kernel = functools.partial(_ws_linear_kernel_scratch, wt_scale=wt_scale)
        scratch = [pltpu.VMEM((tm, tn), jnp.float32)]

    return pl.pallas_call(
        kernel,
        out_shape=jax.ShapeDtypeStruct((M, N), x.dtype),
        grid_spec=pltpu.PrefetchScalarGridSpec(
            num_scalar_prefetch=0,
            grid=grid,
            in_specs=in_specs,
            out_specs=out_spec,
            scratch_shapes=scratch,
        ),
        compiler_params=pltpu.CompilerParams(
            dimension_semantics=("parallel", "parallel", "arbitrary"),
            vmem_limit_bytes=32 * 1024 * 1024,   # explicit, safe on v5e/v6e/v7x
        ),
    )(x, weight, b2d)


# ----------------------------------------------------------------------------
# Self-test
# ----------------------------------------------------------------------------
if __name__ == "__main__":
    key = jax.random.PRNGKey(0)
    kx1, kw1, kx2, kw2, kb2 = jax.random.split(key, 5)

    # Case 1: module-sized small problem (single-block fast path).
    #   nn.init.normal_(weight) -> N(0,1), nn.init.constant_(bias, 0).
    batch, in_dim, out_dim = 16, 256, 128
    wt_scale = np.sqrt(2.0) / np.sqrt(in_dim)
    weight = jax.random.normal(kw1, (out_dim, in_dim), dtype=jnp.float32)
    bias = jnp.zeros((out_dim,), dtype=jnp.float32)
    x = jax.random.normal(kx1, (batch, in_dim), dtype=jnp.float32)

    y = jax.block_until_ready(ws_linear(x, weight, bias, wt_scale))
    y_ref = (x * wt_scale) @ weight.T + bias
    np.testing.assert_allclose(np.asarray(y), np.asarray(y_ref),
                               rtol=1e-5, atol=1e-5)

    # Case 2: force the tiled path (exercises the K-reduction grid and the
    # nonzero-bias epilogue, e.g. a trained-state bias).
    M2, K2, N2 = 256, 1024, 256
    wt_scale2 = np.sqrt(2.0) / np.sqrt(K2)
    weight2 = jax.random.normal(kw2, (N2, K2), dtype=jnp.float32)
    bias2 = 0.1 * jax.random.normal(kb2, (N2,), dtype=jnp.float32)
    x2 = jax.random.normal(kx2, (M2, K2), dtype=jnp.float32)

    y2 = jax.block_until_ready(
        ws_linear(x2, weight2, bias2, wt_scale2, single_block=False))
    y2_ref = (x2 * wt_scale2) @ weight2.T + bias2
    np.testing.assert_allclose(np.asarray(y2), np.asarray(y2_ref),
                               rtol=2e-4, atol=2e-4)

    print("KERNEL_OK")
</pallas_src>

<mosaic_0001>
module attributes {stable_mosaic.version = 11 : i64} {
  func.func @_ws_linear_single_block_kernel(%arg0: memref<16x256xf32, #tpu.memory_space<vmem>>, %arg1: memref<128x256xf32, #tpu.memory_space<vmem>>, %arg2: memref<1x128xf32, #tpu.memory_space<vmem>>, %arg3: memref<16x128xf32, #tpu.memory_space<vmem>>) attributes {dimension_semantics = [], scalar_prefetch = 0 : i64, scratch_operands = 0 : i64, tpu.core_type = #tpu.core_type<tc>} {
    %c0 = arith.constant 0 : index
    %c0_0 = arith.constant 0 : index
    %0 = vector.load %arg0[%c0, %c0_0] : memref<16x256xf32, #tpu.memory_space<vmem>>, vector<16x256xf32>
    %c0_1 = arith.constant 0 : index
    %c0_2 = arith.constant 0 : index
    %1 = vector.load %arg1[%c0_1, %c0_2] : memref<128x256xf32, #tpu.memory_space<vmem>>, vector<128x256xf32>
    %cst = arith.constant dense<0.000000e+00> : vector<16x128xf32>
    %2 = tpu.matmul %0, %1, %cst {dimension_numbers = #tpu.dot_dimension_numbers<[1], [1], [0], [0], [0, 0, 1, 0], [], []>} : vector<16x256xf32>, vector<128x256xf32>, vector<16x128xf32> -> vector<16x128xf32>
    %cst_3 = arith.constant 0.0883883461 : f32
    %3 = vector.broadcast %cst_3 : f32 to vector<16x128xf32>
    %4 = arith.mulf %2, %3 : vector<16x128xf32>
    %c0_4 = arith.constant 0 : index
    %c0_5 = arith.constant 0 : index
    %5 = vector.load %arg2[%c0_4, %c0_5] : memref<1x128xf32, #tpu.memory_space<vmem>>, vector<1x128xf32>
    %6 = vector.broadcast %5 : vector<1x128xf32> to vector<16x128xf32>
    %7 = arith.addf %4, %6 : vector<16x128xf32>
    %c0_6 = arith.constant 0 : index
    %c0_7 = arith.constant 0 : index
    %8 = vector.load %arg3[%c0_6, %c0_7] : memref<16x128xf32, #tpu.memory_space<vmem>>, vector<16x128xf32>
    tpu.vector_store %arg3[%c0_6, %c0_7], %7 {strides = array<i32>} : memref<16x128xf32, #tpu.memory_space<vmem>>, vector<16x128xf32>,
    return
  }
}

</mosaic_0001>

<llo_original>
// kernel: tpu_custom_call.1
$region0: #{tpu_custom_call.1}
  #allocation0 [shape = 'u32[]', space=smem, size = 0x4, offset = 0x4, fixed_abs, tag = 'smem constant byte address 0x4 - core index']
  #allocation1 [shape = 'u32[72,128]{1,0:T(1,128)}', space=vmem, size = 0x9000, scoped, tag = 'internal scratch']
  %s0 = inlined_call_operand.hbm [shape: f32[16,256], index: 0, kind: input, shape index: {}]
  %s1 = inlined_call_operand.hbm [shape: f32[128,256], index: 1, kind: input, shape index: {}]
  %s2 = inlined_call_operand.vmem [shape: f32[1,128], index: 2, kind: input, shape index: {}]
  %s3 = inlined_call_operand.hbm [shape: f32[16,128], index: 3, kind: output, shape index: {}]
  %s4 = sld [smem:[#allocation0]]
  $region30: #{tpu_custom_call.1} parent=0
    _
  %s6 = ssub.s32 1, %s4
  %s7 = scalar_select 0, %s6, %s4
  $region1: #{tpu_custom_call.1} parent=0
    #allocation2 [shape = 'u8[16384]{0}', space=vmem, size = 0x4000, scoped, tag = 'input window, operand 0, single buffered']
    #allocation3 [shape = 's32[1]{0}', space=sflag, size = 0x4, scoped, tag = 'scoped memory for tpu_custom_call.1']
    #allocation4 [shape = 's32[1]{0}', space=sflag, size = 0x4, scoped, tag = 'scoped memory for tpu_custom_call.1']
    #allocation5 [shape = 'u8[131072]{0}', space=vmem, size = 0x20000, scoped, tag = 'input window, operand 1, single buffered']
    #allocation6 [shape = 's32[1]{0}', space=sflag, size = 0x4, scoped, tag = 'scoped memory for tpu_custom_call.1']
    #allocation7 [shape = 'u8[8192]{0}', space=vmem, size = 0x2000, scoped, tag = 'output window, operand 0, single buffered']
    %8 = vsyncpa [#allocation3], 0
    %9 = vsyncpa [#allocation6], 0
    %10 = vsyncpa [#allocation4], 0
    // Predicated region
    $region2: #{tpu_custom_call.1} parent=1 // pred_check
      _
    $region3: #{tpu_custom_call.1} parent=1 // pred_check_branch
      %12 = sbr.rel (0) target = $region5
    $region4: #{tpu_custom_call.1} parent=1 // pred_region
      %14 = vsyncadd [#allocation3], 0
      %s15 = sshll.u32 %s0, 4
      %s16 = int_to_ptr.hbm [resolvable:$true] %s15
      %s17 = sshll.u32 [#allocation2], 4
      %s18 = int_to_ptr.vmem [resolvable:$true] %s17
      %23 = dma.hbm_to_vmem [thread:$0]  %s16, 512, %s18, [#allocation3], 256, 256, 16
    $region5: #{tpu_custom_call.1} parent=1 // pred_fallthru
      _
    // Predicated region
    $region6: #{tpu_custom_call.1} parent=1 // pred_check
      _
    $region7: #{tpu_custom_call.1} parent=1 // pred_check_branch
      %25 = sbr.rel (0) target = $region9
    $region8: #{tpu_custom_call.1} parent=1 // pred_region
      %27 = vsyncadd [#allocation6], 0
      %s28 = sshll.u32 %s1, 4
      %s29 = int_to_ptr.hbm [resolvable:$true] %s28
      %s30 = sshll.u32 [#allocation5], 4
      %s31 = int_to_ptr.vmem [resolvable:$true] %s30
      %36 = dma.hbm_to_vmem [thread:$0]  %s29, 4096, %s31, [#allocation6], 256, 256, 16
    $region9: #{tpu_custom_call.1} parent=1 // pred_fallthru
      _
    // Predicated region
    $region10: #{tpu_custom_call.1} parent=1 // pred_check
      _
    $region11: #{tpu_custom_call.1} parent=1 // pred_check_branch
      %38 = sbr.rel (0) target = $region13
    $region12: #{tpu_custom_call.1} parent=1 // pred_region
      _
    $region13: #{tpu_custom_call.1} parent=1 // pred_fallthru
      _
    // Predicated region
    $region14: #{tpu_custom_call.1} parent=1 // pred_check
      _
    $region15: #{tpu_custom_call.1} parent=1 // pred_check_branch
      %40 = sbr.rel (0) target = $region17
    $region16: #{tpu_custom_call.1} parent=1 // pred_region
      %42 = dma.done [#allocation3], 512
    $region17: #{tpu_custom_call.1} parent=1 // pred_fallthru
      _
    // Predicated region
    $region18: #{tpu_custom_call.1} parent=1 // pred_check
      _
    $region19: #{tpu_custom_call.1} parent=1 // pred_check_branch
      %44 = sbr.rel (0) target = $region21
    $region20: #{tpu_custom_call.1} parent=1 // pred_region
      %46 = dma.done [#allocation6], 4096
    $region21: #{tpu_custom_call.1} parent=1 // pred_fallthru
      _
    %v47 = vld [vmem:[#allocation2] sm:$0xff]
    %v48 = vld [vmem:[#allocation2 + $0x8] sm:$0xff]
    %v49 = vld [vmem:[#allocation2 + $0x10] sm:$0xff]
    %v50 = vld [vmem:[#allocation2 + $0x18] sm:$0xff]
    %v51 = vld [vmem:[#allocation5] sm:$0xff]
    %v52 = vld [vmem:[#allocation5 + $0x8] sm:$0xff]
    %v53 = vld [vmem:[#allocation5 + $0x10] sm:$0xff]
    %v54 = vld [vmem:[#allocation5 + $0x18] sm:$0xff]
    %v55 = vld [vmem:[#allocation5 + $0x20] sm:$0xff]
    %v56 = vld [vmem:[#allocation5 + $0x28] sm:$0xff]
    %v57 = vld [vmem:[#allocation5 + $0x30] sm:$0xff]
    %v58 = vld [vmem:[#allocation5 + $0x38] sm:$0xff]
    %v59 = vld [vmem:[#allocation5 + $0x40] sm:$0xff]
    %v60 = vld [vmem:[#allocation5 + $0x48] sm:$0xff]
    %v61 = vld [vmem:[#allocation5 + $0x50] sm:$0xff]
    %v62 = vld [vmem:[#allocation5 + $0x58] sm:$0xff]
    %v63 = vld [vmem:[#allocation5 + $0x60] sm:$0xff]
    %v64 = vld [vmem:[#allocation5 + $0x68] sm:$0xff]
    %v65 = vld [vmem:[#allocation5 + $0x70] sm:$0xff]
    %v66 = vld [vmem:[#allocation5 + $0x78] sm:$0xff]
    %v67 = vld [vmem:[#allocation5 + $0x80] sm:$0xff]
    %v68 = vld [vmem:[#allocation5 + $0x88] sm:$0xff]
    %v69 = vld [vmem:[#allocation5 + $0x90] sm:$0xff]
    %v70 = vld [vmem:[#allocation5 + $0x98] sm:$0xff]
    %v71 = vld [vmem:[#allocation5 + $0xa0] sm:$0xff]
    %v72 = vld [vmem:[#allocation5 + $0xa8] sm:$0xff]
    %v73 = vld [vmem:[#allocation5 + $0xb0] sm:$0xff]
    %v74 = vld [vmem:[#allocation5 + $0xb8] sm:$0xff]
    %v75 = vld [vmem:[#allocation5 + $0xc0] sm:$0xff]
    %v76 = vld [vmem:[#allocation5 + $0xc8] sm:$0xff]
    %v77 = vld [vmem:[#allocation5 + $0xd0] sm:$0xff]
    %v78 = vld [vmem:[#allocation5 + $0xd8] sm:$0xff]
    %v79 = vld [vmem:[#allocation5 + $0xe0] sm:$0xff]
    %v80 = vld [vmem:[#allocation5 + $0xe8] sm:$0xff]
    %v81 = vld [vmem:[#allocation5 + $0xf0] sm:$0xff]
    %v82 = vld [vmem:[#allocation5 + $0xf8] sm:$0xff]
    %83 = vmatpush.xpose.msra.mxu0 %v81
    %84 = vmatpush.xpose.msra.mxu0 %v79
    %85 = vmatpush.xpose.msra.mxu0 %v77
    %86 = vmatpush.xpose.msra.mxu0 %v75
    %87 = vmatpush.xpose.msra.mxu0 %v73
    %88 = vmatpush.xpose.msra.mxu0 %v71
    %89 = vmatpush.xpose.msra.mxu0 %v69
    %90 = vmatpush.xpose.msra.mxu0 %v67
    %91 = vmatpush.xpose.msra.mxu0 %v65
    %92 = vmatpush.xpose.msra.mxu0 %v63
    %93 = vmatpush.xpose.msra.mxu0 %v61
    %94 = vmatpush.xpose.msra.mxu0 %v59
    %95 = vmatpush.xpose.msra.mxu0 %v57
    %96 = vmatpush.xpose.msra.mxu0 %v55
    %97 = vmatpush.xpose.msra.mxu0 %v53
    %98 = vmatpush.xpose.msra.mxu0 %v51
    %99 = vmatmul.f32.gmra.mxu0 %v47
    %v100 = vpop.f32.mrf.mxu0
    %v101 = vadd.f32 0.0, %v100
    %102 = vmatmul.f32.gmra.mxu0 %v49
    %v103 = vpop.f32.mrf.mxu0
    %v104 = vadd.f32 0.0, %v103
    %105 = vdwg.mxu0
    %106 = vmatpush.xpose.msra.mxu0 %v82
    %107 = vmatpush.xpose.msra.mxu0 %v80
    %108 = vmatpush.xpose.msra.mxu0 %v78
    %109 = vmatpush.xpose.msra.mxu0 %v76
    %110 = vmatpush.xpose.msra.mxu0 %v74
    %111 = vmatpush.xpose.msra.mxu0 %v72
    %112 = vmatpush.xpose.msra.mxu0 %v70
    %113 = vmatpush.xpose.msra.mxu0 %v68
    %114 = vmatpush.xpose.msra.mxu0 %v66
    %115 = vmatpush.xpose.msra.mxu0 %v64
    %116 = vmatpush.xpose.msra.mxu0 %v62
    %117 = vmatpush.xpose.msra.mxu0 %v60
    %118 = vmatpush.xpose.msra.mxu0 %v58
    %119 = vmatpush.xpose.msra.mxu0 %v56
    %120 = vmatpush.xpose.msra.mxu0 %v54
    %121 = vmatpush.xpose.msra.mxu0 %v52
    %122 = vmatmul.f32.gmra.mxu0 %v48
    %v123 = vpop.f32.mrf.mxu0
    %v124 = vadd.f32 %v101, %v123
    %125 = vmatmul.f32.gmra.mxu0 %v50
    %v126 = vpop.f32.mrf.mxu0
    %v127 = vadd.f32 %v104, %v126
    %128 = vdwg.mxu0
    %v129 = vmul.f32 %v124, 0.088388346
    %v130 = vmul.f32 %v127, 0.088388346
    %v131 = vld [vmem:[%s2] sm:$0x1]
    %v133 = vperm.slane %v131, 0
    %v135 = vadd.f32 %v129, %v133
    %v136 = vadd.f32 %v130, %v133
    %137 = vst [vmem:[#allocation7] sm:$0xff] %v135
    %138 = vst [vmem:[#allocation7 + $0x8] sm:$0xff] %v136
    // Predicated region
    $region22: #{tpu_custom_call.1} parent=1 // pred_check
      _
    $region23: #{tpu_custom_call.1} parent=1 // pred_check_branch
      %140 = sbr.rel (0) target = $region25
    $region24: #{tpu_custom_call.1} parent=1 // pred_region
      %142 = vsyncadd [#allocation4], 0
      %s143 = sshll.u32 [#allocation7], 4
      %s144 = int_to_ptr.vmem [resolvable:$true] %s143
      %s145 = sshll.u32 %s3, 4
      %s146 = int_to_ptr.hbm [resolvable:$true] %s145
      %151 = dma.vmem_to_hbm [thread:$0]  %s144, 256, %s146, [#allocation4], 128, 128, 8
    $region25: #{tpu_custom_call.1} parent=1 // pred_fallthru
      _
    // Predicated region
    $region26: #{tpu_custom_call.1} parent=1 // pred_check
      _
    $region27: #{tpu_custom_call.1} parent=1 // pred_check_branch
      %153 = sbr.rel (0) target = $region29
    $region28: #{tpu_custom_call.1} parent=1 // pred_region
      %155 = dma.done [#allocation4], 256
    $region29: #{tpu_custom_call.1} parent=1 // pred_fallthru
      _
    %156 = vsyncpa [#allocation3], 1
    %157 = vsyncpa [#allocation6], 1
    %158 = vsyncpa [#allocation4], 1

</llo_original>
